<compile_context>
chip_gen: v7x
topology: tpu7x:2x2x1
jax: 0.10.0
libtpu: 0.0.40
codegen_flags: <defaults>
</compile_context>

<pallas_src>
import functools

import jax
import jax.numpy as jnp
from jax.experimental import pallas as pl
from jax.experimental.pallas import tpu as pltpu


def _linear_kernel(x_ref, w_ref, b_ref, o_ref):
    # One (tm, N) output slab: full-K matmul on the MXU with f32 accumulation,
    # broadcast bias add on the VPU in f32, single lane-dense (width-512) store.
    acc = jnp.dot(x_ref[...], w_ref[...], preferred_element_type=jnp.float32)
    o_ref[...] = (acc + b_ref[...]).astype(o_ref.dtype)


def _round_up(a, m):
    return (a + m - 1) // m * m


@functools.partial(
    jax.jit, static_argnames=("tm_max", "out_dtype", "xla_fallback_rows")
)
def all_to_one_context(x, w_t, b, *, tm_max=1024, out_dtype=None,
                       xla_fallback_rows=0):
    """y = x @ w_t + b  with x:(M,K), w_t:(K,N), b:(1,N).  Any M is accepted.

    x / w_t may be f32 or bf16; accumulation and the bias add are always f32.
    out_dtype defaults to x.dtype.  If M <= xla_fallback_rows the call falls back
    to a plain XLA dot (tiny batches are pure launch/DMA latency).
    """
    M, K = x.shape
    K2, N = w_t.shape
    assert K == K2 and b.shape == (1, N)

    if out_dtype is None:
        out_dtype = x.dtype
    out_dtype = jnp.dtype(out_dtype)

    # Tiny-batch regime: the custom-call + fixed DMA overhead dominates; let XLA
    # fuse it instead (disabled by default).
    if M <= xla_fallback_rows:
        acc = jnp.dot(x, w_t, preferred_element_type=jnp.float32)
        return (acc + b).astype(out_dtype)

    # ---- Row-tile selection -------------------------------------------------
    # dtype-aware sublane multiple: 8 (f32), 16 (bf16), 32 (int8/fp8).
    sub = max(8, 32 // x.dtype.itemsize)
    tm_cap = max(sub, (tm_max // sub) * sub)
    # Aim for >=2 grid blocks so v7x's two TensorCores both get work
    # (a no-op for single-core chips: just 2 grid steps instead of 1).
    half = _round_up(pl.cdiv(M, 2), sub)
    tm = max(sub, min(tm_cap, half))
    grid_m = pl.cdiv(M, tm)          # ragged: last block is masked on store

    # ---- Explicit VMEM budget (double-buffered, conservative) ----------------
    vmem_bytes = (
        2 * tm * K * x.dtype.itemsize          # x tiles (double-buffered)
        + 2 * K * N * w_t.dtype.itemsize       # weight (resident; budget 2 bufs)
        + 2 * 8 * N * b.dtype.itemsize         # bias (padded to 8 sublanes)
        + 2 * tm * N * out_dtype.itemsize      # output tiles (double-buffered)
        + (2 << 20)                            # slack for Mosaic scratch
    )
    vmem_limit = int(min(vmem_bytes, 64 << 20))

    cost = pl.CostEstimate(
        flops=2 * M * K * N,
        transcendentals=0,
        bytes_accessed=(M * K * x.dtype.itemsize
                        + K * N * w_t.dtype.itemsize
                        + N * b.dtype.itemsize
                        + M * N * out_dtype.itemsize),
    )

    return pl.pallas_call(
        _linear_kernel,
        out_shape=jax.ShapeDtypeStruct((M, N), out_dtype),
        grid=(grid_m,),
        in_specs=[
            pl.BlockSpec((tm, K), lambda i: (i, 0)),   # x row tile (full K)
            pl.BlockSpec((K, N), lambda i: (0, 0)),    # full weight, VMEM-resident
            pl.BlockSpec((1, N), lambda i: (0, 0)),    # full bias, VMEM-resident
        ],
        out_specs=pl.BlockSpec((tm, N), lambda i: (i, 0)),  # lane-dense width N
        compiler_params=pltpu.CompilerParams(
            dimension_semantics=("parallel",),
            vmem_limit_bytes=vmem_limit,
        ),
        cost_estimate=cost,
    )(x, w_t, b)


if __name__ == "__main__":
    input_size = 256   # module default
    out_size = 512     # nn.Linear(input_size, 512)

    key = jax.random.PRNGKey(0)
    kx, kw, kb = jax.random.split(key, 3)

    # Deterministic synthetic parameters (PyTorch shapes: W (512, 256), b (512,)).
    w = jax.random.normal(kw, (out_size, input_size), dtype=jnp.float32) * 0.02
    b = jax.random.normal(kb, (out_size,), dtype=jnp.float32) * 0.02

    # Glue in plain JAX: transpose weight to (K, N), reshape bias to (1, N).
    w_t = jnp.transpose(w)          # (256, 512)
    b2 = b.reshape(1, out_size)     # (1, 512)

    # 1) Small f32 batch -> single-block grid, everything resident in VMEM.
    x = jax.random.normal(kx, (8, input_size), dtype=jnp.float32)
    y = all_to_one_context(x, w_t, b2)
    jax.block_until_ready(y)
    assert y.shape == (8, out_size)
    assert jnp.allclose(y, x @ w_t + b2, atol=1e-4, rtol=1e-4)

    # 2) Ragged batch (not a multiple of the row tile): 2-block grid, masked
    #    last block — exercises the no-pad / no-slice path.
    x_odd = jax.random.normal(kx, (200, input_size), dtype=jnp.float32)
    y_odd = all_to_one_context(x_odd, w_t, b2)
    jax.block_until_ready(y_odd)
    assert y_odd.shape == (200, out_size)
    assert jnp.allclose(y_odd, x_odd @ w_t + b2, atol=1e-4, rtol=1e-4)

    # 3) bf16 activations + weights, f32 accumulate + f32 bias, bf16 output
    #    (the v6e/v7x traffic-halving path; row tile rounds to 16 sublanes).
    x16 = jax.random.normal(kx, (16, input_size), dtype=jnp.float32)
    x_bf = x16.astype(jnp.bfloat16)
    w_bf = w_t.astype(jnp.bfloat16)
    y_bf = all_to_one_context(x_bf, w_bf, b2, out_dtype=jnp.bfloat16)
    jax.block_until_ready(y_bf)
    ref_bf = x_bf.astype(jnp.float32) @ w_bf.astype(jnp.float32) + b2
    assert y_bf.shape == (16, out_size)
    assert y_bf.dtype == jnp.bfloat16
    assert jnp.allclose(y_bf.astype(jnp.float32), ref_bf, atol=3e-2, rtol=3e-2)

    # 4) Tiny-batch XLA fallback path (launch-latency regime).
    y_fb = all_to_one_context(x, w_t, b2, xla_fallback_rows=64)
    jax.block_until_ready(y_fb)
    assert jnp.allclose(y_fb, x @ w_t + b2, atol=1e-4, rtol=1e-4)

    print("KERNEL_OK")
</pallas_src>

<mosaic_0001>
module attributes {stable_mosaic.version = 11 : i64} {
  func.func @_linear_kernel(%arg0: i32, %arg1: memref<8x256xf32, #tpu.memory_space<vmem>>, %arg2: memref<256x512xf32, #tpu.memory_space<vmem>>, %arg3: memref<1x512xf32, #tpu.memory_space<vmem>>, %arg4: memref<8x512xf32, #tpu.memory_space<vmem>>) attributes {dimension_semantics = [#tpu.dimension_semantics<parallel>], iteration_bounds = array<i64: 1>, scalar_prefetch = 0 : i64, scratch_operands = 0 : i64, tpu.core_type = #tpu.core_type<tc>, window_params = [{transform_indices = @transform_0, window_bounds = array<i64: 8, 256>}, {pipeline_mode = #tpu.pipeline_mode<synchronous>, transform_indices = @transform_1, window_bounds = array<i64: 256, 512>}, {pipeline_mode = #tpu.pipeline_mode<synchronous>, transform_indices = @transform_2, window_bounds = array<i64: 1, 512>}, {transform_indices = @transform_3, window_bounds = array<i64: 8, 512>}]} {
    %c0 = arith.constant 0 : index
    %c0_0 = arith.constant 0 : index
    %0 = vector.load %arg1[%c0, %c0_0] : memref<8x256xf32, #tpu.memory_space<vmem>>, vector<8x256xf32>
    %c0_1 = arith.constant 0 : index
    %c0_2 = arith.constant 0 : index
    %1 = vector.load %arg2[%c0_1, %c0_2] : memref<256x512xf32, #tpu.memory_space<vmem>>, vector<256x512xf32>
    %cst = arith.constant dense<0.000000e+00> : vector<8x512xf32>
    %2 = tpu.matmul %0, %1, %cst {dimension_numbers = #tpu.dot_dimension_numbers<[1], [0], [0], [1], [0, 0, 1, 1], [], []>} : vector<8x256xf32>, vector<256x512xf32>, vector<8x512xf32> -> vector<8x512xf32>
    %c0_3 = arith.constant 0 : index
    %c0_4 = arith.constant 0 : index
    %3 = vector.load %arg3[%c0_3, %c0_4] : memref<1x512xf32, #tpu.memory_space<vmem>>, vector<1x512xf32>
    %4 = vector.broadcast %3 : vector<1x512xf32> to vector<8x512xf32>
    %5 = arith.addf %2, %4 : vector<8x512xf32>
    %c0_5 = arith.constant 0 : index
    %c0_6 = arith.constant 0 : index
    %6 = vector.load %arg4[%c0_5, %c0_6] : memref<8x512xf32, #tpu.memory_space<vmem>>, vector<8x512xf32>
    tpu.vector_store %arg4[%c0_5, %c0_6], %5 {strides = array<i32>} : memref<8x512xf32, #tpu.memory_space<vmem>>, vector<8x512xf32>,
    return
  }
  func.func @transform_0(%arg0: i32) -> (i32, i32) {
    %c0_i32 = arith.constant 0 : i32
    %c0_i32_0 = arith.constant 0 : i32
    return %arg0, %c0_i32 : i32, i32
  }
  func.func @transform_1(%arg0: i32) -> (i32, i32) {
    %c0_i32 = arith.constant 0 : i32
    %c0_i32_0 = arith.constant 0 : i32
    %c0_i32_1 = arith.constant 0 : i32
    return %c0_i32, %c0_i32_0 : i32, i32
  }
  func.func @transform_2(%arg0: i32) -> (i32, i32) {
    %c0_i32 = arith.constant 0 : i32
    %c0_i32_0 = arith.constant 0 : i32
    %c0_i32_1 = arith.constant 0 : i32
    return %c0_i32, %c0_i32_0 : i32, i32
  }
  func.func @transform_3(%arg0: i32) -> (i32, i32) {
    %c0_i32 = arith.constant 0 : i32
    %c0_i32_0 = arith.constant 0 : i32
    return %arg0, %c0_i32 : i32, i32
  }
}

</mosaic_0001>

<llo_original>
// kernel: all_to_one_context.1
$region0: #{all_to_one_context.1}
  #allocation0 [shape = 'u32[]', space=smem, size = 0x4, offset = 0x4, fixed_abs, tag = 'smem constant byte address 0x4 - core index']
  #allocation1 [shape = 'u32[144,128]{1,0:T(1,128)}', space=vmem, size = 0x12000, scoped, tag = 'internal scratch']
  %s0 = inlined_call_operand.hbm [shape: f32[8,256], index: 0, kind: input, shape index: {}]
  %s1 = inlined_call_operand.hbm [shape: f32[256,512], index: 1, kind: input, shape index: {}]
  %s2 = inlined_call_operand.vmem [shape: f32[1,512], index: 2, kind: input, shape index: {}]
  %s3 = inlined_call_operand.hbm [shape: f32[8,512], index: 3, kind: output, shape index: {}]
  %s4 = sld [smem:[#allocation0]]
  $region30: #{all_to_one_context.1} parent=0
    _
  %s6 = ssub.s32 1, %s4
  %s7 = scalar_select 0, %s6, %s4
  $region1: #{all_to_one_context.1} parent=0
    #allocation2 [shape = 'u8[8192]{0}', space=vmem, size = 0x2000, scoped, tag = 'input window, operand 0, single buffered']
    #allocation3 [shape = 's32[1]{0}', space=sflag, size = 0x4, scoped, tag = 'scoped memory for all_to_one_context.1']
    #allocation4 [shape = 's32[1]{0}', space=sflag, size = 0x4, scoped, tag = 'scoped memory for all_to_one_context.1']
    #allocation5 [shape = 'u8[524288]{0}', space=vmem, size = 0x80000, scoped, tag = 'input window, operand 1, single buffered']
    #allocation6 [shape = 's32[1]{0}', space=sflag, size = 0x4, scoped, tag = 'scoped memory for all_to_one_context.1']
    #allocation7 [shape = 'u8[16384]{0}', space=vmem, size = 0x4000, scoped, tag = 'output window, operand 0, single buffered']
    %8 = vsyncpa [#allocation3], 0
    %9 = vsyncpa [#allocation6], 0
    %10 = vsyncpa [#allocation4], 0
    // Predicated region
    $region2: #{all_to_one_context.1} parent=1 // pred_check
      _
    $region3: #{all_to_one_context.1} parent=1 // pred_check_branch
      %12 = sbr.rel (0) target = $region5
    $region4: #{all_to_one_context.1} parent=1 // pred_region
      %s14 = ssub.s32 256, 256
      %15 = vsyncadd [#allocation3], %s14
      %s17 = sshll.u32 [#allocation2], 4
      %s18 = int_to_ptr.vmem [resolvable:$true] %s17
      %20 = dma.hbm_to_vmem [thread:$0]  %s0, 256, %s18, [#allocation3]
    $region5: #{all_to_one_context.1} parent=1 // pred_fallthru
      _
    // Predicated region
    $region6: #{all_to_one_context.1} parent=1 // pred_check
      _
    $region7: #{all_to_one_context.1} parent=1 // pred_check_branch
      %22 = sbr.rel (0) target = $region9
    $region8: #{all_to_one_context.1} parent=1 // pred_region
      %s24 = ssub.s32 16384, 16384
      %25 = vsyncadd [#allocation6], %s24
      %s26 = sshll.u32 [#allocation5], 4
      %s27 = int_to_ptr.vmem [resolvable:$true] %s26
      %32 = dma.hbm_to_vmem [thread:$0]  %s1, 16384, %s27, [#allocation6], 512, 512, 32
    $region9: #{all_to_one_context.1} parent=1 // pred_fallthru
      _
    // Predicated region
    $region10: #{all_to_one_context.1} parent=1 // pred_check
      _
    $region11: #{all_to_one_context.1} parent=1 // pred_check_branch
      %34 = sbr.rel (0) target = $region13
    $region12: #{all_to_one_context.1} parent=1 // pred_region
      _
    $region13: #{all_to_one_context.1} parent=1 // pred_fallthru
      _
    // Predicated region
    $region14: #{all_to_one_context.1} parent=1 // pred_check
      _
    $region15: #{all_to_one_context.1} parent=1 // pred_check_branch
      %36 = sbr.rel (0) target = $region17
    $region16: #{all_to_one_context.1} parent=1 // pred_region
      %37 = dma.done [#allocation3], 256
    $region17: #{all_to_one_context.1} parent=1 // pred_fallthru
      _
    // Predicated region
    $region18: #{all_to_one_context.1} parent=1 // pred_check
      _
    $region19: #{all_to_one_context.1} parent=1 // pred_check_branch
      %39 = sbr.rel (0) target = $region21
    $region20: #{all_to_one_context.1} parent=1 // pred_region
      %40 = dma.done [#allocation6], 16384
    $region21: #{all_to_one_context.1} parent=1 // pred_fallthru
      _
    %v41 = vld [vmem:[#allocation2] sm:$0xff]
    %v42 = vld [vmem:[#allocation2 + $0x8] sm:$0xff]
    %v43 = vld [vmem:[#allocation5] sm:$0xff]
    %v44 = vld [vmem:[#allocation5 + $0x8] sm:$0xff]
    %v45 = vld [vmem:[#allocation5 + $0x10] sm:$0xff]
    %v46 = vld [vmem:[#allocation5 + $0x18] sm:$0xff]
    %v47 = vld [vmem:[#allocation5 + $0x20] sm:$0xff]
    %v48 = vld [vmem:[#allocation5 + $0x28] sm:$0xff]
    %v49 = vld [vmem:[#allocation5 + $0x30] sm:$0xff]
    %v50 = vld [vmem:[#allocation5 + $0x38] sm:$0xff]
    %v51 = vld [vmem:[#allocation5 + $0x40] sm:$0xff]
    %v52 = vld [vmem:[#allocation5 + $0x48] sm:$0xff]
    %v53 = vld [vmem:[#allocation5 + $0x50] sm:$0xff]
    %v54 = vld [vmem:[#allocation5 + $0x58] sm:$0xff]
    %v55 = vld [vmem:[#allocation5 + $0x60] sm:$0xff]
    %v56 = vld [vmem:[#allocation5 + $0x68] sm:$0xff]
    %v57 = vld [vmem:[#allocation5 + $0x70] sm:$0xff]
    %v58 = vld [vmem:[#allocation5 + $0x78] sm:$0xff]
    %v59 = vld [vmem:[#allocation5 + $0x80] sm:$0xff]
    %v60 = vld [vmem:[#allocation5 + $0x88] sm:$0xff]
    %v61 = vld [vmem:[#allocation5 + $0x90] sm:$0xff]
    %v62 = vld [vmem:[#allocation5 + $0x98] sm:$0xff]
    %v63 = vld [vmem:[#allocation5 + $0xa0] sm:$0xff]
    %v64 = vld [vmem:[#allocation5 + $0xa8] sm:$0xff]
    %v65 = vld [vmem:[#allocation5 + $0xb0] sm:$0xff]
    %v66 = vld [vmem:[#allocation5 + $0xb8] sm:$0xff]
    %v67 = vld [vmem:[#allocation5 + $0xc0] sm:$0xff]
    %v68 = vld [vmem:[#allocation5 + $0xc8] sm:$0xff]
    %v69 = vld [vmem:[#allocation5 + $0xd0] sm:$0xff]
    %v70 = vld [vmem:[#allocation5 + $0xd8] sm:$0xff]
    %v71 = vld [vmem:[#allocation5 + $0xe0] sm:$0xff]
    %v72 = vld [vmem:[#allocation5 + $0xe8] sm:$0xff]
    %v73 = vld [vmem:[#allocation5 + $0xf0] sm:$0xff]
    %v74 = vld [vmem:[#allocation5 + $0xf8] sm:$0xff]
    %v75 = vld [vmem:[#allocation5 + $0x100] sm:$0xff]
    %v76 = vld [vmem:[#allocation5 + $0x108] sm:$0xff]
    %v77 = vld [vmem:[#allocation5 + $0x110] sm:$0xff]
    %v78 = vld [vmem:[#allocation5 + $0x118] sm:$0xff]
    %v79 = vld [vmem:[#allocation5 + $0x120] sm:$0xff]
    %v80 = vld [vmem:[#allocation5 + $0x128] sm:$0xff]
    %v81 = vld [vmem:[#allocation5 + $0x130] sm:$0xff]
    %v82 = vld [vmem:[#allocation5 + $0x138] sm:$0xff]
    %v83 = vld [vmem:[#allocation5 + $0x140] sm:$0xff]
    %v84 = vld [vmem:[#allocation5 + $0x148] sm:$0xff]
    %v85 = vld [vmem:[#allocation5 + $0x150] sm:$0xff]
    %v86 = vld [vmem:[#allocation5 + $0x158] sm:$0xff]
    %v87 = vld [vmem:[#allocation5 + $0x160] sm:$0xff]
    %v88 = vld [vmem:[#allocation5 + $0x168] sm:$0xff]
    %v89 = vld [vmem:[#allocation5 + $0x170] sm:$0xff]
    %v90 = vld [vmem:[#allocation5 + $0x178] sm:$0xff]
    %v91 = vld [vmem:[#allocation5 + $0x180] sm:$0xff]
    %v92 = vld [vmem:[#allocation5 + $0x188] sm:$0xff]
    %v93 = vld [vmem:[#allocation5 + $0x190] sm:$0xff]
    %v94 = vld [vmem:[#allocation5 + $0x198] sm:$0xff]
    %v95 = vld [vmem:[#allocation5 + $0x1a0] sm:$0xff]
    %v96 = vld [vmem:[#allocation5 + $0x1a8] sm:$0xff]
    %v97 = vld [vmem:[#allocation5 + $0x1b0] sm:$0xff]
    %v98 = vld [vmem:[#allocation5 + $0x1b8] sm:$0xff]
    %v99 = vld [vmem:[#allocation5 + $0x1c0] sm:$0xff]
    %v100 = vld [vmem:[#allocation5 + $0x1c8] sm:$0xff]
    %v101 = vld [vmem:[#allocation5 + $0x1d0] sm:$0xff]
    %v102 = vld [vmem:[#allocation5 + $0x1d8] sm:$0xff]
    %v103 = vld [vmem:[#allocation5 + $0x1e0] sm:$0xff]
    %v104 = vld [vmem:[#allocation5 + $0x1e8] sm:$0xff]
    %v105 = vld [vmem:[#allocation5 + $0x1f0] sm:$0xff]
    %v106 = vld [vmem:[#allocation5 + $0x1f8] sm:$0xff]
    %v107 = vld [vmem:[#allocation5 + $0x200] sm:$0xff]
    %v108 = vld [vmem:[#allocation5 + $0x208] sm:$0xff]
    %v109 = vld [vmem:[#allocation5 + $0x210] sm:$0xff]
    %v110 = vld [vmem:[#allocation5 + $0x218] sm:$0xff]
    %v111 = vld [vmem:[#allocation5 + $0x220] sm:$0xff]
    %v112 = vld [vmem:[#allocation5 + $0x228] sm:$0xff]
    %v113 = vld [vmem:[#allocation5 + $0x230] sm:$0xff]
    %v114 = vld [vmem:[#allocation5 + $0x238] sm:$0xff]
    %v115 = vld [vmem:[#allocation5 + $0x240] sm:$0xff]
    %v116 = vld [vmem:[#allocation5 + $0x248] sm:$0xff]
    %v117 = vld [vmem:[#allocation5 + $0x250] sm:$0xff]
    %v118 = vld [vmem:[#allocation5 + $0x258] sm:$0xff]
    %v119 = vld [vmem:[#allocation5 + $0x260] sm:$0xff]
    %v120 = vld [vmem:[#allocation5 + $0x268] sm:$0xff]
    %v121 = vld [vmem:[#allocation5 + $0x270] sm:$0xff]
    %v122 = vld [vmem:[#allocation5 + $0x278] sm:$0xff]
    %v123 = vld [vmem:[#allocation5 + $0x280] sm:$0xff]
    %v124 = vld [vmem:[#allocation5 + $0x288] sm:$0xff]
    %v125 = vld [vmem:[#allocation5 + $0x290] sm:$0xff]
    %v126 = vld [vmem:[#allocation5 + $0x298] sm:$0xff]
    %v127 = vld [vmem:[#allocation5 + $0x2a0] sm:$0xff]
    %v128 = vld [vmem:[#allocation5 + $0x2a8] sm:$0xff]
    %v129 = vld [vmem:[#allocation5 + $0x2b0] sm:$0xff]
    %v130 = vld [vmem:[#allocation5 + $0x2b8] sm:$0xff]
    %v131 = vld [vmem:[#allocation5 + $0x2c0] sm:$0xff]
    %v132 = vld [vmem:[#allocation5 + $0x2c8] sm:$0xff]
    %v133 = vld [vmem:[#allocation5 + $0x2d0] sm:$0xff]
    %v134 = vld [vmem:[#allocation5 + $0x2d8] sm:$0xff]
    %v135 = vld [vmem:[#allocation5 + $0x2e0] sm:$0xff]
    %v136 = vld [vmem:[#allocation5 + $0x2e8] sm:$0xff]
    %v137 = vld [vmem:[#allocation5 + $0x2f0] sm:$0xff]
    %v138 = vld [vmem:[#allocation5 + $0x2f8] sm:$0xff]
    %v139 = vld [vmem:[#allocation5 + $0x300] sm:$0xff]
    %v140 = vld [vmem:[#allocation5 + $0x308] sm:$0xff]
    %v141 = vld [vmem:[#allocation5 + $0x310] sm:$0xff]
    %v142 = vld [vmem:[#allocation5 + $0x318] sm:$0xff]
    %v143 = vld [vmem:[#allocation5 + $0x320] sm:$0xff]
    %v144 = vld [vmem:[#allocation5 + $0x328] sm:$0xff]
    %v145 = vld [vmem:[#allocation5 + $0x330] sm:$0xff]
    %v146 = vld [vmem:[#allocation5 + $0x338] sm:$0xff]
    %v147 = vld [vmem:[#allocation5 + $0x340] sm:$0xff]
    %v148 = vld [vmem:[#allocation5 + $0x348] sm:$0xff]
    %v149 = vld [vmem:[#allocation5 + $0x350] sm:$0xff]
    %v150 = vld [vmem:[#allocation5 + $0x358] sm:$0xff]
    %v151 = vld [vmem:[#allocation5 + $0x360] sm:$0xff]
    %v152 = vld [vmem:[#allocation5 + $0x368] sm:$0xff]
    %v153 = vld [vmem:[#allocation5 + $0x370] sm:$0xff]
    %v154 = vld [vmem:[#allocation5 + $0x378] sm:$0xff]
    %v155 = vld [vmem:[#allocation5 + $0x380] sm:$0xff]
    %v156 = vld [vmem:[#allocation5 + $0x388] sm:$0xff]
    %v157 = vld [vmem:[#allocation5 + $0x390] sm:$0xff]
    %v158 = vld [vmem:[#allocation5 + $0x398] sm:$0xff]
    %v159 = vld [vmem:[#allocation5 + $0x3a0] sm:$0xff]
    %v160 = vld [vmem:[#allocation5 + $0x3a8] sm:$0xff]
    %v161 = vld [vmem:[#allocation5 + $0x3b0] sm:$0xff]
    %v162 = vld [vmem:[#allocation5 + $0x3b8] sm:$0xff]
    %v163 = vld [vmem:[#allocation5 + $0x3c0] sm:$0xff]
    %v164 = vld [vmem:[#allocation5 + $0x3c8] sm:$0xff]
    %v165 = vld [vmem:[#allocation5 + $0x3d0] sm:$0xff]
    %v166 = vld [vmem:[#allocation5 + $0x3d8] sm:$0xff]
    %v167 = vld [vmem:[#allocation5 + $0x3e0] sm:$0xff]
    %v168 = vld [vmem:[#allocation5 + $0x3e8] sm:$0xff]
    %v169 = vld [vmem:[#allocation5 + $0x3f0] sm:$0xff]
    %v170 = vld [vmem:[#allocation5 + $0x3f8] sm:$0xff]
    %v171 = vld [vmem:[%s2] sm:$0xf]
    %v173 = vlaneseq
    %v174 = vshrl.u32 %v173, 7
    %v175 = vsub.s32 0, %v174
    %v176 = vrot.slane %v171, %v175
    %v177 = vlaneseq
    %v178 = vshrl.u32 %v177, 7
    %v179 = vsub.s32 1, %v178
    %v180 = vrot.slane %v171, %v179
    %v181 = vlaneseq
    %v182 = vshrl.u32 %v181, 7
    %v183 = vsub.s32 2, %v182
    %v184 = vrot.slane %v171, %v183
    %v185 = vlaneseq
    %v186 = vshrl.u32 %v185, 7
    %v187 = vsub.s32 3, %v186
    %v188 = vrot.slane %v171, %v187
    %193 = vmatprep.subr.mxu0 %v44
    %194 = vmatpush1.msra.mxu0 %v43
    %195 = vmatprep.subr.mxu0 %v48
    %196 = vmatpush1.msra.mxu0 %v47
    %197 = vmatprep.subr.mxu0 %v52
    %198 = vmatpush1.msra.mxu0 %v51
    %199 = vmatprep.subr.mxu0 %v56
    %200 = vmatpush1.msra.mxu0 %v55
    %201 = vmatprep.subr.mxu0 %v60
    %202 = vmatpush1.msra.mxu0 %v59
    %203 = vmatprep.subr.mxu0 %v64
    %204 = vmatpush1.msra.mxu0 %v63
    %205 = vmatprep.subr.mxu0 %v68
    %206 = vmatpush1.msra.mxu0 %v67
    %207 = vmatprep.subr.mxu0 %v72
    %208 = vmatpush1.msra.mxu0 %v71
    %209 = vmatprep.subr.mxu0 %v76
    %210 = vmatpush1.msra.mxu0 %v75
    %211 = vmatprep.subr.mxu0 %v80
    %212 = vmatpush1.msra.mxu0 %v79
    %213 = vmatprep.subr.mxu0 %v84
    %214 = vmatpush1.msra.mxu0 %v83
    %215 = vmatprep.subr.mxu0 %v88
    %216 = vmatpush1.msra.mxu0 %v87
    %217 = vmatprep.subr.mxu0 %v92
    %218 = vmatpush1.msra.mxu0 %v91
    %219 = vmatprep.subr.mxu0 %v96
    %220 = vmatpush1.msra.mxu0 %v95
    %221 = vmatprep.subr.mxu0 %v100
    %222 = vmatpush1.msra.mxu0 %v99
    %223 = vmatprep.subr.mxu0 %v104
    %224 = vmatpush1.msra.mxu0 %v103
    %225 = vmatprep.subr.mxu0 %v108
    %226 = vmatpush1.msra.mxu0 %v107
    %227 = vmatprep.subr.mxu0 %v112
    %228 = vmatpush1.msra.mxu0 %v111
    %229 = vmatprep.subr.mxu0 %v116
    %230 = vmatpush1.msra.mxu0 %v115
    %231 = vmatprep.subr.mxu0 %v120
    %232 = vmatpush1.msra.mxu0 %v119
    %233 = vmatprep.subr.mxu0 %v124
    %234 = vmatpush1.msra.mxu0 %v123
    %235 = vmatprep.subr.mxu0 %v128
    %236 = vmatpush1.msra.mxu0 %v127
    %237 = vmatprep.subr.mxu0 %v132
    %238 = vmatpush1.msra.mxu0 %v131
    %239 = vmatprep.subr.mxu0 %v136
    %240 = vmatpush1.msra.mxu0 %v135
    %241 = vmatprep.subr.mxu0 %v140
    %242 = vmatpush1.msra.mxu0 %v139
    %243 = vmatprep.subr.mxu0 %v144
    %244 = vmatpush1.msra.mxu0 %v143
    %245 = vmatprep.subr.mxu0 %v148
    %246 = vmatpush1.msra.mxu0 %v147
    %247 = vmatprep.subr.mxu0 %v152
    %248 = vmatpush1.msra.mxu0 %v151
    %249 = vmatprep.subr.mxu0 %v156
    %250 = vmatpush1.msra.mxu0 %v155
    %251 = vmatprep.subr.mxu0 %v160
    %252 = vmatpush1.msra.mxu0 %v159
    %253 = vmatprep.subr.mxu0 %v164
    %254 = vmatpush1.msra.mxu0 %v163
    %255 = vmatprep.subr.mxu0 %v168
    %256 = vmatpush1.msra.mxu0 %v167
    %257 = vmatprep.mubr.f32.mxu0 %v42
    %258 = vmatmul.mubr.f32.gmra.mrb[0].mxu0 %v41
    %v259 = vpop.f32.mrb[0].mxu0
    %v260 = vadd.f32 %v176, %v259
    %v261 = vpop.f32.mrb[0].mxu0
    %v262 = vadd.f32 %v180, %v261
    %263 = vdwg.mxu0
    %264 = vmatprep.subr.mxu0 %v46
    %265 = vmatpush1.msra.mxu0 %v45
    %266 = vmatprep.subr.mxu0 %v50
    %267 = vmatpush1.msra.mxu0 %v49
    %268 = vmatprep.subr.mxu0 %v54
    %269 = vmatpush1.msra.mxu0 %v53
    %270 = vmatprep.subr.mxu0 %v58
    %271 = vmatpush1.msra.mxu0 %v57
    %272 = vmatprep.subr.mxu0 %v62
    %273 = vmatpush1.msra.mxu0 %v61
    %274 = vmatprep.subr.mxu0 %v66
    %275 = vmatpush1.msra.mxu0 %v65
    %276 = vmatprep.subr.mxu0 %v70
    %277 = vmatpush1.msra.mxu0 %v69
    %278 = vmatprep.subr.mxu0 %v74
    %279 = vmatpush1.msra.mxu0 %v73
    %280 = vmatprep.subr.mxu0 %v78
    %281 = vmatpush1.msra.mxu0 %v77
    %282 = vmatprep.subr.mxu0 %v82
    %283 = vmatpush1.msra.mxu0 %v81
    %284 = vmatprep.subr.mxu0 %v86
    %285 = vmatpush1.msra.mxu0 %v85
    %286 = vmatprep.subr.mxu0 %v90
    %287 = vmatpush1.msra.mxu0 %v89
    %288 = vmatprep.subr.mxu0 %v94
    %289 = vmatpush1.msra.mxu0 %v93
    %290 = vmatprep.subr.mxu0 %v98
    %291 = vmatpush1.msra.mxu0 %v97
    %292 = vmatprep.subr.mxu0 %v102
    %293 = vmatpush1.msra.mxu0 %v101
    %294 = vmatprep.subr.mxu0 %v106
    %295 = vmatpush1.msra.mxu0 %v105
    %296 = vmatprep.subr.mxu0 %v110
    %297 = vmatpush1.msra.mxu0 %v109
    %298 = vmatprep.subr.mxu0 %v114
    %299 = vmatpush1.msra.mxu0 %v113
    %300 = vmatprep.subr.mxu0 %v118
    %301 = vmatpush1.msra.mxu0 %v117
    %302 = vmatprep.subr.mxu0 %v122
    %303 = vmatpush1.msra.mxu0 %v121
    %304 = vmatprep.subr.mxu0 %v126
    %305 = vmatpush1.msra.mxu0 %v125
    %306 = vmatprep.subr.mxu0 %v130
    %307 = vmatpush1.msra.mxu0 %v129
    %308 = vmatprep.subr.mxu0 %v134
    %309 = vmatpush1.msra.mxu0 %v133
    %310 = vmatprep.subr.mxu0 %v138
    %311 = vmatpush1.msra.mxu0 %v137
    %312 = vmatprep.subr.mxu0 %v142
    %313 = vmatpush1.msra.mxu0 %v141
    %314 = vmatprep.subr.mxu0 %v146
    %315 = vmatpush1.msra.mxu0 %v145
    %316 = vmatprep.subr.mxu0 %v150
    %317 = vmatpush1.msra.mxu0 %v149
    %318 = vmatprep.subr.mxu0 %v154
    %319 = vmatpush1.msra.mxu0 %v153
    %320 = vmatprep.subr.mxu0 %v158
    %321 = vmatpush1.msra.mxu0 %v157
    %322 = vmatprep.subr.mxu0 %v162
    %323 = vmatpush1.msra.mxu0 %v161
    %324 = vmatprep.subr.mxu0 %v166
    %325 = vmatpush1.msra.mxu0 %v165
    %326 = vmatprep.subr.mxu0 %v170
    %327 = vmatpush1.msra.mxu0 %v169
    %328 = vmatprep.mubr.f32.mxu0 %v42
    %329 = vmatmul.mubr.f32.gmra.mrb[0].mxu0 %v41
    %v330 = vpop.f32.mrb[0].mxu0
    %v331 = vadd.f32 %v184, %v330
    %v332 = vpop.f32.mrb[0].mxu0
    %v333 = vadd.f32 %v188, %v332
    %334 = vdwg.mxu0
    %335 = vst [vmem:[#allocation7] sm:$0xff] %v260
    %336 = vst [vmem:[#allocation7 + $0x8] sm:$0xff] %v262
    %337 = vst [vmem:[#allocation7 + $0x10] sm:$0xff] %v331
    %338 = vst [vmem:[#allocation7 + $0x18] sm:$0xff] %v333
    // Predicated region
    $region22: #{all_to_one_context.1} parent=1 // pred_check
      _
    $region23: #{all_to_one_context.1} parent=1 // pred_check_branch
      %340 = sbr.rel (0) target = $region25
    $region24: #{all_to_one_context.1} parent=1 // pred_region
      %s342 = ssub.s32 512, 512
      %343 = vsyncadd [#allocation4], %s342
      %s345 = sshll.u32 [#allocation7], 4
      %s346 = int_to_ptr.vmem [resolvable:$true] %s345
      %348 = dma.vmem_to_hbm [thread:$0]  %s346, 512, %s3, [#allocation4]
    $region25: #{all_to_one_context.1} parent=1 // pred_fallthru
      _
    // Predicated region
    $region26: #{all_to_one_context.1} parent=1 // pred_check
      _
    $region27: #{all_to_one_context.1} parent=1 // pred_check_branch
      %350 = sbr.rel (0) target = $region29
    $region28: #{all_to_one_context.1} parent=1 // pred_region
      %351 = dma.done [#allocation4], 512
    $region29: #{all_to_one_context.1} parent=1 // pred_fallthru
      _
    %352 = vsyncpa [#allocation3], 1
    %353 = vsyncpa [#allocation6], 1
    %354 = vsyncpa [#allocation4], 1

</llo_original>
